<compile_context>
chip_gen: v7x
topology: tpu7x:2x2x1
jax: 0.10.0
libtpu: 0.0.40
codegen_flags: <defaults>
</compile_context>

<pallas_src>
import functools

import jax
import jax.numpy as jnp
import numpy as np
from jax import lax
from jax.experimental import pallas as pl
from jax.experimental.pallas import tpu as pltpu


def _round_up(x, m):
    return (x + m - 1) // m * m


def _span_block_kernel(starts_ref, ends_ref, logits_ref, seq_ref, out_ref,
                       *, s_blk, t_pad):
    """One (batch, span-block) grid step.

    starts_ref/ends_ref : (s_blk, 1) int32  inclusive span bounds
    logits_ref          : (1, t_pad) f32    precomputed global attention logits
    seq_ref             : (t_pad, d_pad)    sequence embeddings (this batch elem)
    out_ref             : (s_blk, d_pad)    attended span embeddings
    """
    starts = starts_ref[...]                                        # (s_blk, 1)
    ends = ends_ref[...]                                            # (s_blk, 1)
    token = lax.broadcasted_iota(jnp.int32, (s_blk, t_pad), 1)      # (s_blk, t_pad)
    valid = (token >= starts) & (token <= ends)

    # masked_softmax(..., memory_efficient=True, mask_fill_value=-1000) over the
    # tokens of each span; token axis is lane-major so max/exp/sum are
    # lane-parallel (XLU lane reductions + EUP exp).
    masked = jnp.where(valid, logits_ref[...], jnp.float32(-1000.0))
    m = jnp.max(masked, axis=1, keepdims=True)                      # (s_blk, 1)
    e = jnp.exp(masked - m)
    denom = jnp.sum(e, axis=1, keepdims=True)                       # (s_blk, 1)
    weights = e * pl.reciprocal(denom, approx=False)                # (s_blk, t_pad)

    # Weighted span sums as ONE well-shaped MXU matmul.
    # (For bf16 sequence data, cast `weights` down instead of upcasting seq.)
    attended = jnp.dot(weights, seq_ref[...].astype(jnp.float32),
                       preferred_element_type=jnp.float32)          # (s_blk, d_pad)
    out_ref[...] = attended.astype(out_ref.dtype)


def self_attentive_span_extractor(sequence_tensor,
                                  span_indices,
                                  weight,
                                  bias,
                                  span_indices_mask=None,
                                  span_block=128):
    """JAX/Pallas equivalent of SelfAttentiveSpanExtractor.forward."""
    B, T, D = sequence_tensor.shape
    S = span_indices.shape[1]
    out_dtype = sequence_tensor.dtype

    starts = span_indices[..., 0].astype(jnp.int32)                 # (B, S)
    ends = span_indices[..., 1].astype(jnp.int32)                   # (B, S)

    t_pad = _round_up(T, 128)                 # lane-dense K axis of the matmul
    d_pad = _round_up(D, 128)                 # lane-dense output / seq tiles
    s_blk = max(8, min(span_block, _round_up(S, 8)))
    if B == 1:
        # v7x megacore: give the parallel grid >= 2 blocks when possible.
        while s_blk > 8 and _round_up(S, s_blk) // s_blk < 2:
            s_blk //= 2
    s_pad = _round_up(S, s_blk)
    n_sblk = s_pad // s_blk

    # Global attention logits: one XLA matmul over the whole batch, not per span.
    seq_f32 = sequence_tensor.astype(jnp.float32)
    w_col = weight.reshape(D, 1).astype(jnp.float32)
    logits = seq_f32 @ w_col + bias.reshape(1, 1).astype(jnp.float32)   # (B, T, 1)
    logits = jnp.swapaxes(logits, 1, 2)                                 # (B, 1, T)
    logits = jnp.pad(logits, ((0, 0), (0, 0), (0, t_pad - T)))          # (B, 1, t_pad)

    seq = jnp.pad(sequence_tensor, ((0, 0), (0, t_pad - T), (0, d_pad - D)))

    pad_s = s_pad - S
    starts_p = jnp.pad(starts, ((0, 0), (0, pad_s)))[..., None]     # (B, s_pad, 1)
    ends_p = jnp.pad(ends, ((0, 0), (0, pad_s)))[..., None]         # (B, s_pad, 1)

    kernel = functools.partial(_span_block_kernel, s_blk=s_blk, t_pad=t_pad)

    itemsize = jnp.dtype(out_dtype).itemsize
    cost = pl.CostEstimate(
        flops=2 * B * s_pad * t_pad * d_pad,
        transcendentals=B * s_pad * t_pad,
        bytes_accessed=(B * t_pad * d_pad * itemsize        # sequence
                        + B * t_pad * 4                      # logits
                        + 2 * B * s_pad * 4                  # starts / ends
                        + B * s_pad * d_pad * itemsize),     # output
    )

    out = pl.pallas_call(
        kernel,
        out_shape=jax.ShapeDtypeStruct((B, s_pad, d_pad), out_dtype),
        grid=(B, n_sblk),
        in_specs=[
            pl.BlockSpec((None, s_blk, 1), lambda b, sb: (b, sb, 0)),      # starts
            pl.BlockSpec((None, s_blk, 1), lambda b, sb: (b, sb, 0)),      # ends
            pl.BlockSpec((None, 1, t_pad), lambda b, sb: (b, 0, 0)),       # logits
            # Whole padded sequence of this batch element; block index only
            # changes with b, so it is not re-DMA'd across span blocks.
            pl.BlockSpec((None, t_pad, d_pad), lambda b, sb: (b, 0, 0)),   # seq
        ],
        out_specs=pl.BlockSpec((None, s_blk, d_pad), lambda b, sb: (b, sb, 0)),
        compiler_params=pltpu.CompilerParams(
            dimension_semantics=("parallel", "parallel")),
        cost_estimate=cost,
    )(starts_p, ends_p, logits, seq)

    out = out[:, :S, :D]
    if span_indices_mask is not None:
        out = out * span_indices_mask[..., None].astype(out.dtype)
    return out


def _reference(sequence_tensor, span_indices, weight, bias, span_indices_mask=None):
    """Pure-JAX reference mirroring the PyTorch module."""
    seq = sequence_tensor.astype(jnp.float32)
    B, T, D = seq.shape
    starts = span_indices[..., 0].astype(jnp.int32)
    ends = span_indices[..., 1].astype(jnp.int32)
    widths = ends - starts
    W = int(jax.device_get(jnp.max(widths))) + 1

    logits = seq @ weight.reshape(D, 1).astype(jnp.float32) \
        + bias.reshape(1, 1).astype(jnp.float32)                    # (B, T, 1)

    arange_w = jnp.arange(W, dtype=jnp.int32)[None, None, :]
    raw = ends[:, :, None] - arange_w
    mask = ((arange_w <= widths[:, :, None]) & (raw >= 0)).astype(jnp.float32)
    idx = jnp.maximum(raw, 0)

    gather = jax.vmap(lambda t, i: t[i])
    span_emb = gather(seq, idx)                                     # (B, S, W, D)
    span_logits = gather(logits, idx)[..., 0]                       # (B, S, W)

    masked = jnp.where(mask > 0.0, span_logits, jnp.float32(-1000.0))
    wts = jax.nn.softmax(masked, axis=-1)
    attended = jnp.sum(span_emb * wts[..., None], axis=-2)          # (B, S, D)
    if span_indices_mask is not None:
        attended = attended * span_indices_mask[..., None].astype(attended.dtype)
    return attended


if __name__ == "__main__":
    B, T, D, S = 2, 16, 32, 4

    key = jax.random.PRNGKey(0)
    k_seq, k_start, k_width, k_w, k_b = jax.random.split(key, 5)

    sequence_tensor = jax.random.normal(k_seq, (B, T, D), dtype=jnp.float32)

    starts = jax.random.randint(k_start, (B, S), 0, T)
    widths = jax.random.randint(k_width, (B, S), 0, 5)
    ends = jnp.minimum(starts + widths, T - 1)
    span_indices = jnp.stack([starts, ends], axis=-1).astype(jnp.int32)  # (B, S, 2)

    # deterministic Linear(D, 1) parameters
    weight = jax.random.normal(k_w, (1, D), dtype=jnp.float32) * 0.1
    bias = jax.random.normal(k_b, (1,), dtype=jnp.float32) * 0.1

    span_indices_mask = jnp.array([[1, 1, 1, 0], [1, 1, 1, 1]], dtype=jnp.int32)

    out = self_attentive_span_extractor(sequence_tensor, span_indices,
                                        weight, bias, span_indices_mask)
    out = jax.block_until_ready(out)

    ref = _reference(sequence_tensor, span_indices, weight, bias, span_indices_mask)
    # Tolerance covers the MXU f32 matmul under default precision (the reference
    # accumulates the weighted sum with exact f32 VPU ops instead).
    np.testing.assert_allclose(np.asarray(out), np.asarray(ref), rtol=1e-2, atol=1e-2)

    print("KERNEL_OK")
</pallas_src>

<mosaic_0001>
module attributes {stable_mosaic.version = 11 : i64} {
  func.func @_span_block_kernel(%arg0: i32, %arg1: i32, %arg2: memref<1x8x1xi32, #tpu.memory_space<vmem>>, %arg3: memref<1x8x1xi32, #tpu.memory_space<vmem>>, %arg4: memref<1x1x128xf32, #tpu.memory_space<vmem>>, %arg5: memref<1x128x128xf32, #tpu.memory_space<vmem>>, %arg6: memref<1x8x128xf32, #tpu.memory_space<vmem>>) attributes {dimension_semantics = [#tpu.dimension_semantics<parallel>, #tpu.dimension_semantics<parallel>], iteration_bounds = array<i64: 2, 1>, scalar_prefetch = 0 : i64, scratch_operands = 0 : i64, tpu.core_type = #tpu.core_type<tc>, window_params = [{transform_indices = @transform_0, window_bounds = array<i64: 1, 8, 1>}, {transform_indices = @transform_1, window_bounds = array<i64: 1, 8, 1>}, {transform_indices = @transform_2, window_bounds = array<i64: 1, 1, 128>}, {transform_indices = @transform_3, window_bounds = array<i64: 1, 128, 128>}, {transform_indices = @transform_4, window_bounds = array<i64: 1, 8, 128>}]} {
    %c0 = arith.constant 0 : index
    %c0_0 = arith.constant 0 : index
    %c0_1 = arith.constant 0 : index
    %0 = vector.load %arg2[%c0, %c0_0, %c0_1] : memref<1x8x1xi32, #tpu.memory_space<vmem>>, vector<1x8x1xi32>
    %1 = vector.shape_cast %0 : vector<1x8x1xi32> to vector<8x1xi32>
    %c0_2 = arith.constant 0 : index
    %c0_3 = arith.constant 0 : index
    %c0_4 = arith.constant 0 : index
    %2 = vector.load %arg3[%c0_2, %c0_3, %c0_4] : memref<1x8x1xi32, #tpu.memory_space<vmem>>, vector<1x8x1xi32>
    %3 = vector.shape_cast %2 : vector<1x8x1xi32> to vector<8x1xi32>
    %4 = tpu.iota {dimensions = array<i32: 1>} : vector<8x128xi32>
    %5 = vector.broadcast %1 : vector<8x1xi32> to vector<8x128xi32>
    %6 = arith.cmpi sge, %4, %5 : vector<8x128xi32>
    %7 = vector.broadcast %3 : vector<8x1xi32> to vector<8x128xi32>
    %8 = arith.cmpi sle, %4, %7 : vector<8x128xi32>
    %9 = arith.andi %6, %8 : vector<8x128xi1>
    %c0_5 = arith.constant 0 : index
    %c0_6 = arith.constant 0 : index
    %c0_7 = arith.constant 0 : index
    %10 = vector.load %arg4[%c0_5, %c0_6, %c0_7] : memref<1x1x128xf32, #tpu.memory_space<vmem>>, vector<1x1x128xf32>
    %11 = vector.shape_cast %10 : vector<1x1x128xf32> to vector<1x128xf32>
    %cst = arith.constant -1.000000e+03 : f32
    %12 = vector.shape_cast %11 : vector<1x128xf32> to vector<1x128xf32>
    %13 = vector.broadcast %12 : vector<1x128xf32> to vector<8x128xf32>
    %14 = vector.broadcast %cst : f32 to vector<8x128xf32>
    %15 = arith.select %9, %13, %14 : vector<8x128xi1>, vector<8x128xf32>
    %cst_8 = arith.constant dense<0xFF800000> : vector<8xf32>
    %16 = vector.multi_reduction <maximumf>, %15, %cst_8 [1] : vector<8x128xf32> to vector<8xf32>
    %17 = vector.shape_cast %16 : vector<8xf32> to vector<8x1xf32>
    %18 = vector.broadcast %17 : vector<8x1xf32> to vector<8x128xf32>
    %19 = arith.subf %15, %18 : vector<8x128xf32>
    %20 = math.exp %19 : vector<8x128xf32>
    %cst_9 = arith.constant dense<0.000000e+00> : vector<8xf32>
    %21 = vector.multi_reduction <add>, %20, %cst_9 [1] : vector<8x128xf32> to vector<8xf32>
    %22 = vector.shape_cast %21 : vector<8xf32> to vector<8x1xf32>
    %23 = tpu.reciprocal %22 : vector<8x1xf32> -> vector<8x1xf32>
    %24 = vector.broadcast %23 : vector<8x1xf32> to vector<8x128xf32>
    %25 = arith.mulf %20, %24 : vector<8x128xf32>
    %c0_10 = arith.constant 0 : index
    %c0_11 = arith.constant 0 : index
    %c0_12 = arith.constant 0 : index
    %26 = vector.load %arg5[%c0_10, %c0_11, %c0_12] : memref<1x128x128xf32, #tpu.memory_space<vmem>>, vector<1x128x128xf32>
    %27 = vector.shape_cast %26 : vector<1x128x128xf32> to vector<128x128xf32>
    %cst_13 = arith.constant dense<0.000000e+00> : vector<8x128xf32>
    %28 = tpu.matmul %25, %27, %cst_13 {dimension_numbers = #tpu.dot_dimension_numbers<[1], [0], [0], [1], [0, 0, 1, 1], [], []>} : vector<8x128xf32>, vector<128x128xf32>, vector<8x128xf32> -> vector<8x128xf32>
    %c0_14 = arith.constant 0 : index
    %c0_15 = arith.constant 0 : index
    %c0_16 = arith.constant 0 : index
    %29 = vector.load %arg6[%c0_14, %c0_15, %c0_16] : memref<1x8x128xf32, #tpu.memory_space<vmem>>, vector<1x8x128xf32>
    %30 = vector.shape_cast %29 : vector<1x8x128xf32> to vector<8x128xf32>
    %31 = vector.shape_cast %28 : vector<8x128xf32> to vector<1x8x128xf32>
    tpu.vector_store %arg6[%c0_14, %c0_15, %c0_16], %31 {strides = array<i32>} : memref<1x8x128xf32, #tpu.memory_space<vmem>>, vector<1x8x128xf32>,
    return
  }
  func.func @transform_0(%arg0: i32, %arg1: i32) -> (i32, i32, i32) {
    %c0_i32 = arith.constant 0 : i32
    %c0_i32_0 = arith.constant 0 : i32
    return %arg0, %arg1, %c0_i32 : i32, i32, i32
  }
  func.func @transform_1(%arg0: i32, %arg1: i32) -> (i32, i32, i32) {
    %c0_i32 = arith.constant 0 : i32
    %c0_i32_0 = arith.constant 0 : i32
    return %arg0, %arg1, %c0_i32 : i32, i32, i32
  }
  func.func @transform_2(%arg0: i32, %arg1: i32) -> (i32, i32, i32) {
    %c0_i32 = arith.constant 0 : i32
    %c0_i32_0 = arith.constant 0 : i32
    %c0_i32_1 = arith.constant 0 : i32
    return %arg0, %c0_i32, %c0_i32_0 : i32, i32, i32
  }
  func.func @transform_3(%arg0: i32, %arg1: i32) -> (i32, i32, i32) {
    %c0_i32 = arith.constant 0 : i32
    %c0_i32_0 = arith.constant 0 : i32
    %c0_i32_1 = arith.constant 0 : i32
    return %arg0, %c0_i32, %c0_i32_0 : i32, i32, i32
  }
  func.func @transform_4(%arg0: i32, %arg1: i32) -> (i32, i32, i32) {
    %c0_i32 = arith.constant 0 : i32
    %c0_i32_0 = arith.constant 0 : i32
    return %arg0, %arg1, %c0_i32 : i32, i32, i32
  }
}

</mosaic_0001>

<llo_original>
// kernel: tpu_custom_call.1
$region0: #{tpu_custom_call.1}
  #allocation0 [shape = 'u32[]', space=smem, size = 0x4, offset = 0x4, fixed_abs, tag = 'smem constant byte address 0x4 - core index']
  #allocation1 [shape = 'u32[144,128]{1,0:T(1,128)}', space=vmem, size = 0x12000, scoped, tag = 'internal scratch']
  %s0 = inlined_call_operand.vmem [shape: s32[2,8,1], index: 0, kind: input, shape index: {}]
  %s1 = inlined_call_operand.vmem [shape: s32[2,8,1], index: 1, kind: input, shape index: {}]
  %s2 = inlined_call_operand.vmem [shape: f32[2,1,128], index: 2, kind: input, shape index: {}]
  %s3 = inlined_call_operand.hbm [shape: f32[2,128,128], index: 3, kind: input, shape index: {}]
  %s4 = inlined_call_operand.hbm [shape: f32[2,8,128], index: 4, kind: output, shape index: {}]
  %s5 = sld [smem:[#allocation0]]
  $region53: #{tpu_custom_call.1} parent=0
    _
  %s7 = ssub.s32 1, %s5
  %s8 = scalar_select 0, %s7, %s5
  $region1: #{tpu_custom_call.1} parent=0
    #allocation2 [shape = 'u8[131072]{0}', space=vmem, size = 0x20000, scoped, tag = 'input window, operand 3']
    #allocation3 [shape = 's32[2]{0}', space=sflag, size = 0x8, scoped, tag = 'scoped memory for tpu_custom_call.1']
    #allocation4 [shape = 's32[2]{0}', space=sflag, size = 0x8, scoped, tag = 'scoped memory for tpu_custom_call.1']
    #allocation5 [shape = 'u8[8192]{0}', space=vmem, size = 0x2000, scoped, tag = 'output window, operand 0']
    %9 = vsyncpa [#allocation3], 0
    %s10 = scalar_lea.sflag [#allocation3], 1
    %11 = vsyncpa %s10, 0
    %12 = vsyncpa [#allocation4], 0
    %s13 = scalar_lea.sflag [#allocation4], 1
    %14 = vsyncpa %s13, 0
    loop: start=0, step=1, limit=4
    $region2: #{tpu_custom_call.1} parent=1 // loop_pre_header
      _
    $region3: #{tpu_custom_call.1} parent=1 // loop_header
      %s16 = sphi 0, %s20
      %p17 = scmp.ge.s32.totalorder %s16, 4
      %s23 = sphi 0, %s35
      %s24 = sphi 0, %s31
      %s25 = sphi 0, %s23
      %s26 = sphi 0, %s24
      %s27 = sphi 0, %s25
      %s28 = sphi 0, %s26
      %s40 = sphi 0, %s42
      %s43 = sphi 0, %s40
      %s44 = sphi 0, %s43
      %s60 = sphi 0, %s44
      %s68 = sphi 0, %s70
      %s71 = sphi 0, %s68
      %s72 = sphi 0, %s71
      %s88 = sphi 0, %s72
      %s94 = sphi 0, %s96
      %s97 = sphi 0, %s94
      %s98 = sphi 0, %s97
      %s114 = sphi 0, %s98
      %s120 = sphi 0, %s122
      %s123 = sphi 0, %s120
      %s124 = sphi 0, %s123
      %s140 = sphi 0, %s124
      %s148 = sphi 0, %s150
      %s151 = sphi 0, %s148
      %s152 = sphi 0, %s151
      %s168 = sphi 0, %s152
    $region4: #{tpu_custom_call.1} parent=1 // loop_header_branch
      %19 = sbr.rel (%p17) target = $region8
    $region5: #{tpu_custom_call.1} parent=1 // loop_body
      %s21 = ssub.s32 %s16, 1
      %s22 = ssub.s32 %s16, 2
      %s29 = sadd.s32 1, %s24
      %p30 = scmp.ge.s32.totalorder %s29, 1
      %s31 = scalar_select %p30, 0, %s29
      %s32 = sadd.s32 1, %s23
      %s33 = scalar_select %p30, %s32, %s23
      %p34 = scmp.ge.s32.totalorder %s33, 2
      %s35 = scalar_select %p34, 0, %s33
      %s36 = ssub.s32 %s23, %s35
      %s37 = ssub.s32 %s24, %s31
      %s38 = sor.u32 %s36, %s37
      %p39 = scmp.eq.s32.totalorder %s38, 0
      %s41 = sadd.s32 %s40, 1
      %s42 = scalar_select %p39, %s40, %s41
      %p45 = pneg %p39
      %p46 = scmp.eq.s32.totalorder %s16, 1
      %p47 = por %p45, %p46
      %p48 = scmp.ne.s32.totalorder %s40, %s43
      %p49 = scmp.eq.s32.totalorder %s16, 0
      %p50 = por %p48, %p49
      %p51 = scmp.ne.s32.totalorder %s40, %s43
      %p52 = scmp.eq.s32.totalorder %s21, 1
      %p53 = por %p51, %p52
      %p54 = scmp.ne.s32.totalorder %s43, %s44
      %p55 = scmp.eq.s32.totalorder %s21, 0
      %p56 = por %p54, %p55
      %p57 = scmp.ne.s32.totalorder %s43, %s44
      %p58 = scmp.eq.s32.totalorder %s22, 1
      %p59 = por %p57, %p58
      %p61 = scmp.ne.s32.totalorder %s44, %s60
      %p62 = scmp.eq.s32.totalorder %s22, 0
      %p63 = por %p61, %p62
      %s64 = ssub.s32 %s23, %s35
      %s65 = ssub.s32 %s24, %s31
      %s66 = sor.u32 %s64, %s65
      %p67 = scmp.eq.s32.totalorder %s66, 0
      %s69 = sadd.s32 %s68, 1
      %s70 = scalar_select %p67, %s68, %s69
      %p73 = pneg %p67
      %p74 = scmp.eq.s32.totalorder %s16, 1
      %p75 = por %p73, %p74
      %p76 = scmp.ne.s32.totalorder %s68, %s71
      %p77 = scmp.eq.s32.totalorder %s16, 0
      %p78 = por %p76, %p77
      %p79 = scmp.ne.s32.totalorder %s68, %s71
      %p80 = scmp.eq.s32.totalorder %s21, 1
      %p81 = por %p79, %p80
      %p82 = scmp.ne.s32.totalorder %s71, %s72
      %p83 = scmp.eq.s32.totalorder %s21, 0
      %p84 = por %p82, %p83
      %p85 = scmp.ne.s32.totalorder %s71, %s72
      %p86 = scmp.eq.s32.totalorder %s22, 1
      %p87 = por %p85, %p86
      %p89 = scmp.ne.s32.totalorder %s72, %s88
      %p90 = scmp.eq.s32.totalorder %s22, 0
      %p91 = por %p89, %p90
      %s92 = ssub.s32 %s23, %s35
      %p93 = scmp.eq.s32.totalorder %s92, 0
      %s95 = sadd.s32 %s94, 1
      %s96 = scalar_select %p93, %s94, %s95
      %p99 = pneg %p93
      %p100 = scmp.eq.s32.totalorder %s16, 1
      %p101 = por %p99, %p100
      %p102 = scmp.ne.s32.totalorder %s94, %s97
      %p103 = scmp.eq.s32.totalorder %s16, 0
      %p104 = por %p102, %p103
      %p105 = scmp.ne.s32.totalorder %s94, %s97
      %p106 = scmp.eq.s32.totalorder %s21, 1
      %p107 = por %p105, %p106
      %p108 = scmp.ne.s32.totalorder %s97, %s98
      %p109 = scmp.eq.s32.totalorder %s21, 0
      %p110 = por %p108, %p109
      %p111 = scmp.ne.s32.totalorder %s97, %s98
      %p112 = scmp.eq.s32.totalorder %s22, 1
      %p113 = por %p111, %p112
      %p115 = scmp.ne.s32.totalorder %s98, %s114
      %p116 = scmp.eq.s32.totalorder %s22, 0
      %p117 = por %p115, %p116
      %s118 = ssub.s32 %s23, %s35
      %p119 = scmp.eq.s32.totalorder %s118, 0
      %s121 = sadd.s32 %s120, 1
      %s122 = scalar_select %p119, %s120, %s121
      %p125 = pneg %p119
      %p126 = scmp.eq.s32.totalorder %s16, 1
      %p127 = por %p125, %p126
      %p128 = scmp.ne.s32.totalorder %s120, %s123
      %p129 = scmp.eq.s32.totalorder %s16, 0
      %p130 = por %p128, %p129
      %p131 = scmp.ne.s32.totalorder %s120, %s123
      %p132 = scmp.eq.s32.totalorder %s21, 1
      %p133 = por %p131, %p132
      %p134 = scmp.ne.s32.totalorder %s123, %s124
      %p135 = scmp.eq.s32.totalorder %s21, 0
      %p136 = por %p134, %p135
      %p137 = scmp.ne.s32.totalorder %s123, %s124
      %p138 = scmp.eq.s32.totalorder %s22, 1
      %p139 = por %p137, %p138
      %p141 = scmp.ne.s32.totalorder %s124, %s140
      %p142 = scmp.eq.s32.totalorder %s22, 0
      %p143 = por %p141, %p142
      %s144 = ssub.s32 %s23, %s35
      %s145 = ssub.s32 %s24, %s31
      %s146 = sor.u32 %s144, %s145
      %p147 = scmp.eq.s32.totalorder %s146, 0
      %s149 = sadd.s32 %s148, 1
      %s150 = scalar_select %p147, %s148, %s149
      %p153 = pneg %p147
      %p154 = scmp.eq.s32.totalorder %s16, 1
      %p155 = por %p153, %p154
      %p156 = scmp.ne.s32.totalorder %s148, %s151
      %p157 = scmp.eq.s32.totalorder %s16, 0
      %p158 = por %p156, %p157
      %p159 = scmp.ne.s32.totalorder %s148, %s151
      %p160 = scmp.eq.s32.totalorder %s21, 1
      %p161 = por %p159, %p160
      %p162 = scmp.ne.s32.totalorder %s151, %s152
      %p163 = scmp.eq.s32.totalorder %s21, 0
      %p164 = por %p162, %p163
      %p165 = scmp.ne.s32.totalorder %s151, %s152
      %p166 = scmp.eq.s32.totalorder %s22, 1
      %p167 = por %p165, %p166
      %p169 = scmp.ne.s32.totalorder %s152, %s168
      %p170 = scmp.eq.s32.totalorder %s22, 0
      %p171 = por %p169, %p170
      %p172 = scmp.le.s32.totalorder 1, %s16
      %p173 = scmp.lt.s32.totalorder %s16, 3
      %p174 = pnand %p172, %p173
      %p175 = pneg %p174
      // Predicated region
      $region9: #{tpu_custom_call.1} parent=5 // pred_check
        _
      $region10: #{tpu_custom_call.1} parent=5 // pred_check_branch
        %177 = sbr.rel (%p174) target = $region12
      $region11: #{tpu_custom_call.1} parent=5 // pred_region
        %s178 = ssub.s32 %s16, 1
      $region12: #{tpu_custom_call.1} parent=5 // pred_fallthru
        _
      %p179 = scmp.lt.s32.totalorder %s16, 2
      // Predicated region
      $region13: #{tpu_custom_call.1} parent=5 // pred_check
        %p180 = pneg %p179
      $region14: #{tpu_custom_call.1} parent=5 // pred_check_branch
        %182 = sbr.rel (%p180) target = $region16
      $region15: #{tpu_custom_call.1} parent=5 // pred_region
        // Predicated region
        $region17: #{tpu_custom_call.1} parent=15 // pred_check
          %p183 = pneg %p50
        $region18: #{tpu_custom_call.1} parent=15 // pred_check_branch
          %185 = sbr.rel (%p183) target = $region20
        $region19: #{tpu_custom_call.1} parent=15 // pred_region
          %p186 = scmp.lt.s32.totalorder %s23, 1
          %s187 = scalar_select %p186, %s23, 1
          %p188 = scmp.lt.s32.totalorder %s24, 0
          %s189 = scalar_select %p188, %s24, 0
          %s190 = sadd.s32 %s189, %s187
          %s191 = smul.addr %s190, 8
          %s192 = scalar_lea.vmem %s0, %s191
        $region20: #{tpu_custom_call.1} parent=15 // pred_fallthru
          _
        // Predicated region
        $region21: #{tpu_custom_call.1} parent=15 // pred_check
          %p193 = pneg %p78
        $region22: #{tpu_custom_call.1} parent=15 // pred_check_branch
          %195 = sbr.rel (%p193) target = $region24
        $region23: #{tpu_custom_call.1} parent=15 // pred_region
          %p196 = scmp.lt.s32.totalorder %s23, 1
          %s197 = scalar_select %p196, %s23, 1
          %p198 = scmp.lt.s32.totalorder %s24, 0
          %s199 = scalar_select %p198, %s24, 0
          %s200 = sadd.s32 %s199, %s197
          %s201 = smul.addr %s200, 8
          %s202 = scalar_lea.vmem %s1, %s201
        $region24: #{tpu_custom_call.1} parent=15 // pred_fallthru
          _
        // Predicated region
        $region25: #{tpu_custom_call.1} parent=15 // pred_check
          %p203 = pneg %p104
        $region26: #{tpu_custom_call.1} parent=15 // pred_check_branch
          %205 = sbr.rel (%p203) target = $region28
        $region27: #{tpu_custom_call.1} parent=15 // pred_region
          %p206 = scmp.lt.s32.totalorder %s23, 1
          %s207 = scalar_select %p206, %s23, 1
          %s208 = scalar_lea.vmem %s2, %s207
        $region28: #{tpu_custom_call.1} parent=15 // pred_fallthru
          _
        // Predicated region
        $region29: #{tpu_custom_call.1} parent=15 // pred_check
          %p209 = pneg %p130
        $region30: #{tpu_custom_call.1} parent=15 // pred_check_branch
          %211 = sbr.rel (%p209) target = $region32
        $region31: #{tpu_custom_call.1} parent=15 // pred_region
          %s212 = sand.u32 %s120, 1
          %s213 = scalar_lea.sflag [#allocation3], %s212
          %s214 = sand.u32 %s120, 1
          %s215 = smul.addr %s214, 128
          %s216 = scalar_lea.vmem [#allocation2], %s215
          %s218 = ssub.s32 2048, 2048
          %219 = vsyncadd %s213, %s218
          %s220 = smul.addr %s23, 16
          %s221 = smul.addr %s220, 128
          %s222 = scalar_lea.hbm %s3, %s221
          %s223 = sshll.u32 %s216, 4
          %s224 = int_to_ptr.vmem [resolvable:$true] %s223
          %229 = dma.hbm_to_vmem [thread:$0]  %s222, 2048, %s224, %s213, 128, 128, 8
        $region32: #{tpu_custom_call.1} parent=15 // pred_fallthru
          _
      $region16: #{tpu_custom_call.1} parent=5 // pred_fallthru
        _
      %p230 = scmp.le.s32.totalorder 1, %s16
      %p231 = scmp.lt.s32.totalorder %s16, 3
      %p232 = pnand %p230, %p231
      %p233 = pneg %p232
      // Predicated region
      $region33: #{tpu_custom_call.1} parent=5 // pred_check
        _
      $region34: #{tpu_custom_call.1} parent=5 // pred_check_branch
        %235 = sbr.rel (%p232) target = $region36
      $region35: #{tpu_custom_call.1} parent=5 // pred_region
        %s236 = ssub.s32 %s16, 1
        %s237 = sand.u32 %s123, 1
        %s238 = scalar_lea.sflag [#allocation3], %s237
        %s239 = sand.u32 %s123, 1
        %s240 = smul.addr %s239, 128
        %s241 = scalar_lea.vmem [#allocation2], %s240
        // Predicated region
        $region37: #{tpu_custom_call.1} parent=35 // pred_check
          %p242 = pneg %p136
        $region38: #{tpu_custom_call.1} parent=35 // pred_check_branch
          %244 = sbr.rel (%p242) target = $region40
        $region39: #{tpu_custom_call.1} parent=35 // pred_region
          %245 = dma.done %s238, 2048
        $region40: #{tpu_custom_call.1} parent=35 // pred_fallthru
          _
        %p246 = scmp.lt.s32.totalorder %s25, 1
        %s247 = scalar_select %p246, %s25, 1
        %p248 = scmp.lt.s32.totalorder %s26, 0
        %s249 = scalar_select %p248, %s26, 0
        %s250 = sadd.s32 %s249, %s247
        %s251 = smul.addr %s250, 8
        %s252 = scalar_lea.vmem %s0, %s251
        %p253 = pneg %p56
        %p254 = pneg %p53
        %p255 = scmp.lt.s32.totalorder %s25, 1
        %s256 = scalar_select %p255, %s25, 1
        %p257 = scmp.lt.s32.totalorder %s26, 0
        %s258 = scalar_select %p257, %s26, 0
        %s259 = sadd.s32 %s258, %s256
        %s260 = smul.addr %s259, 8
        %s261 = scalar_lea.vmem %s1, %s260
        %p262 = pneg %p84
        %p263 = pneg %p81
        %p264 = scmp.lt.s32.totalorder %s25, 1
        %s265 = scalar_select %p264, %s25, 1
        %s266 = scalar_lea.vmem %s2, %s265
        %p267 = pneg %p110
        %p268 = pneg %p107
        %s269 = sand.u32 %s123, 1
        %s270 = scalar_lea.sflag [#allocation3], %s269
        %s271 = sand.u32 %s123, 1
        %s272 = smul.addr %s271, 128
        %s273 = scalar_lea.vmem [#allocation2], %s272
        %p274 = pneg %p136
        %p275 = pneg %p133
        %p276 = pneg %p164
        %p277 = pneg %p161
        %s278 = sand.u32 %s151, 1
        %s279 = scalar_lea.sflag [#allocation4], %s278
        %s280 = sand.u32 %s151, 1
        %s281 = smul.addr %s280, 8
        %s282 = scalar_lea.vmem [#allocation5], %s281
        %p283 = scmp.lt.s32.totalorder %s25, 1
        %s284 = scalar_select %p283, %s25, 1
        %p285 = scmp.lt.s32.totalorder %s26, 0
        %s286 = scalar_select %p285, %s26, 0
        %s287 = sadd.s32 %s286, %s284
        %s288 = smul.addr %s287, 8
        %s289 = scalar_lea.vmem %s0, %s288
        %p290 = scmp.lt.s32.totalorder %s25, 1
        %s291 = scalar_select %p290, %s25, 1
        %p292 = scmp.lt.s32.totalorder %s26, 0
        %s293 = scalar_select %p292, %s26, 0
        %s294 = sadd.s32 %s293, %s291
        %s295 = smul.addr %s294, 8
        %s296 = scalar_lea.vmem %s1, %s295
        %p297 = scmp.lt.s32.totalorder %s25, 1
        %s298 = scalar_select %p297, %s25, 1
        %s299 = scalar_lea.vmem %s2, %s298
        %v300 = vld [vmem:[%s289] sm:$0xff]
        %v301 = vld [vmem:[%s296] sm:$0xff]
        %v302 = vlaneseq
        %v303 = vand.u32 %v302, 127
        %304 = vset.pattern.permute.xlu0 0
        %305 = vperm.xlu0 %304, %v300
        %v306 = vpop.permute.xlu0 %305
        %vm307 = vcmp.ge.s32.totalorder %v303, %v306
        %308 = vset.pattern.permute.xlu0 0
        %309 = vperm.xlu0 %308, %v301
        %v310 = vpop.permute.xlu0 %309
        %vm311 = vcmp.le.s32.totalorder %v303, %v310
        %vm312 = vmand %vm307, %vm311
        %v313 = vld [vmem:[%s299] sm:$0x1]
        %v315 = vlaneseq
        %v316 = vshrl.u32 %v315, 7
        %v317 = vsub.s32 0, %v316
        %v318 = vrot.slane %v313, %v317
        %v320 = vsel %vm312, %v318, -1000.0
        %321 = vmax.xlane.f32.xlu0 %v320
        %v322 = vpop.xlane.xlu0 %321
        %v323 = vsub.f32 %v320, %v322
        %v324 = vmul.f32 %v323, 1.442695
        %v325 = vpow.pop %v324
        %326 = vadd.xlane.f32.xlu0 %v325
        %v327 = vpop.xlane.xlu0 %326
        %v328 = vrcp.pop %v327
        %v329 = vmul.f32 %v325, %v328
        %v330 = vld [vmem:[%s241] sm:$0xff]
        %v331 = vld [vmem:[%s241 + $0x8] sm:$0xff]
        %v332 = vld [vmem:[%s241 + $0x10] sm:$0xff]
        %v333 = vld [vmem:[%s241 + $0x18] sm:$0xff]
        %v334 = vld [vmem:[%s241 + $0x20] sm:$0xff]
        %v335 = vld [vmem:[%s241 + $0x28] sm:$0xff]
        %v336 = vld [vmem:[%s241 + $0x30] sm:$0xff]
        %v337 = vld [vmem:[%s241 + $0x38] sm:$0xff]
        %v338 = vld [vmem:[%s241 + $0x40] sm:$0xff]
        %v339 = vld [vmem:[%s241 + $0x48] sm:$0xff]
        %v340 = vld [vmem:[%s241 + $0x50] sm:$0xff]
        %v341 = vld [vmem:[%s241 + $0x58] sm:$0xff]
        %v342 = vld [vmem:[%s241 + $0x60] sm:$0xff]
        %v343 = vld [vmem:[%s241 + $0x68] sm:$0xff]
        %v344 = vld [vmem:[%s241 + $0x70] sm:$0xff]
        %v345 = vld [vmem:[%s241 + $0x78] sm:$0xff]
        %346 = vmatprep.subr.mxu0 0.0
        %347 = vmatpush1.msra.mxu0 %v330
        %348 = vmatprep.subr.mxu0 0.0
        %349 = vmatpush1.msra.mxu0 %v331
        %350 = vmatprep.subr.mxu0 0.0
        %351 = vmatpush1.msra.mxu0 %v332
        %352 = vmatprep.subr.mxu0 0.0
        %353 = vmatpush1.msra.mxu0 %v333
        %354 = vmatprep.subr.mxu0 0.0
        %355 = vmatpush1.msra.mxu0 %v334
        %356 = vmatprep.subr.mxu0 0.0
        %357 = vmatpush1.msra.mxu0 %v335
        %358 = vmatprep.subr.mxu0 0.0
        %359 = vmatpush1.msra.mxu0 %v336
        %360 = vmatprep.subr.mxu0 0.0
        %361 = vmatpush1.msra.mxu0 %v337
        %362 = vmatprep.subr.mxu0 0.0
        %363 = vmatpush1.msra.mxu0 %v338
        %364 = vmatprep.subr.mxu0 0.0
        %365 = vmatpush1.msra.mxu0 %v339
        %366 = vmatprep.subr.mxu0 0.0
        %367 = vmatpush1.msra.mxu0 %v340
        %368 = vmatprep.subr.mxu0 0.0
        %369 = vmatpush1.msra.mxu0 %v341
        %370 = vmatprep.subr.mxu0 0.0
        %371 = vmatpush1.msra.mxu0 %v342
        %372 = vmatprep.subr.mxu0 0.0
        %373 = vmatpush1.msra.mxu0 %v343
        %374 = vmatprep.subr.mxu0 0.0
        %375 = vmatpush1.msra.mxu0 %v344
        %376 = vmatprep.subr.mxu0 0.0
        %377 = vmatpush1.msra.mxu0 %v345
        %378 = vmatprep.subr.mxu0 0.0
        %379 = vmatpush1.msra.mxu0 0.0
        %380 = vmatprep.subr.mxu0 0.0
        %381 = vmatpush1.msra.mxu0 0.0
        %382 = vmatprep.subr.mxu0 0.0
        %383 = vmatpush1.msra.mxu0 0.0
        %384 = vmatprep.subr.mxu0 0.0
        %385 = vmatpush1.msra.mxu0 0.0
        %386 = vmatprep.subr.mxu0 0.0
        %387 = vmatpush1.msra.mxu0 0.0
        %388 = vmatprep.subr.mxu0 0.0
        %389 = vmatpush1.msra.mxu0 0.0
        %390 = vmatprep.subr.mxu0 0.0
        %391 = vmatpush1.msra.mxu0 0.0
        %392 = vmatprep.subr.mxu0 0.0
        %393 = vmatpush1.msra.mxu0 0.0
        %394 = vmatprep.subr.mxu0 0.0
        %395 = vmatpush1.msra.mxu0 0.0
        %396 = vmatprep.subr.mxu0 0.0
        %397 = vmatpush1.msra.mxu0 0.0
        %398 = vmatprep.subr.mxu0 0.0
        %399 = vmatpush1.msra.mxu0 0.0
        %400 = vmatprep.subr.mxu0 0.0
        %401 = vmatpush1.msra.mxu0 0.0
        %402 = vmatprep.subr.mxu0 0.0
        %403 = vmatpush1.msra.mxu0 0.0
        %404 = vmatprep.subr.mxu0 0.0
        %405 = vmatpush1.msra.mxu0 0.0
        %406 = vmatprep.subr.mxu0 0.0
        %407 = vmatpush1.msra.mxu0 0.0
        %408 = vmatprep.subr.mxu0 0.0
        %409 = vmatpush1.msra.mxu0 0.0
        %410 = vmatprep.mubr.f32.mxu0 0.0
        %411 = vmatmul.mubr.f32.gmra.mrb[0].mxu0 %v329
        %v412 = vpop.f32.mrb[0].mxu0
        %v413 = vadd.f32 0.0, %v412
        %v414 = vpop.f32.mrb[0].mxu0
        %415 = vdwg.mxu0
        %416 = vst [vmem:[%s282] sm:$0xff] %v413
        %s417 = sand.u32 %s151, 1
        %s418 = scalar_lea.sflag [#allocation4], %s417
        %s419 = sand.u32 %s151, 1
        %s420 = smul.addr %s419, 8
        %s421 = scalar_lea.vmem [#allocation5], %s420
        // Predicated region
        $region41: #{tpu_custom_call.1} parent=35 // pred_check
          %p422 = pneg %p161
        $region42: #{tpu_custom_call.1} parent=35 // pred_check_branch
          %424 = sbr.rel (%p422) target = $region44
        $region43: #{tpu_custom_call.1} parent=35 // pred_region
          %s426 = ssub.s32 128, 128
          %427 = vsyncadd %s418, %s426
          %s428 = sadd.s32 %s26, %s25
          %s429 = smul.addr %s428, 128
          %s430 = scalar_lea.hbm %s4, %s429
          %s432 = sshll.u32 %s421, 4
          %s433 = int_to_ptr.vmem [resolvable:$true] %s432
          %435 = dma.vmem_to_hbm [thread:$0]  %s433, 128, %s430, %s418
        $region44: #{tpu_custom_call.1} parent=35 // pred_fallthru
          _
      $region36: #{tpu_custom_call.1} parent=5 // pred_fallthru
        _
      %p436 = scmp.le.s32.totalorder 2, %s16
      // Predicated region
      $region45: #{tpu_custom_call.1} parent=5 // pred_check
        %p437 = pneg %p436
      $region46: #{tpu_custom_call.1} parent=5 // pred_check_branch
        %439 = sbr.rel (%p437) target = $region48
      $region47: #{tpu_custom_call.1} parent=5 // pred_region
        %s440 = ssub.s32 %s16, 2
        // Predicated region
        $region49: #{tpu_custom_call.1} parent=47 // pred_check
          %p441 = pneg %p167
        $region50: #{tpu_custom_call.1} parent=47 // pred_check_branch
          %443 = sbr.rel (%p441) target = $region52
        $region51: #{tpu_custom_call.1} parent=47 // pred_region
          %s444 = sand.u32 %s152, 1
          %s445 = scalar_lea.sflag [#allocation4], %s444
          %s446 = sand.u32 %s152, 1
          %s447 = smul.addr %s446, 8
          %s448 = scalar_lea.vmem [#allocation5], %s447
          %449 = dma.done %s445, 128
        $region52: #{tpu_custom_call.1} parent=47 // pred_fallthru
          _
      $region48: #{tpu_custom_call.1} parent=5 // pred_fallthru
        _
    $region6: #{tpu_custom_call.1} parent=1 // loop_footer
      %s20 = sadd.s32 1, %s16
    $region7: #{tpu_custom_call.1} parent=1 // loop_footer_branch
      %15 = sbr.rel target = $region3
    $region8: #{tpu_custom_call.1} parent=1 // loop_exit
      _
    %450 = vsyncpa [#allocation3], 1
    %s451 = scalar_lea.sflag [#allocation3], 1
    %452 = vsyncpa %s451, 1
    %453 = vsyncpa [#allocation4], 1
    %s454 = scalar_lea.sflag [#allocation4], 1
    %455 = vsyncpa %s454, 1

</llo_original>
